<compile_context>
chip_gen: v6e
topology: v6e:2x2x1
jax: 0.10.0
libtpu: 0.0.40
codegen_flags: <defaults>
</compile_context>

<pallas_src>
import functools

import jax
import jax.numpy as jnp
from jax.experimental import pallas as pl
from jax.experimental.pallas import tpu as pltpu

_LANE = 128
_SUBLANE = 8


def _round_up(x, m):
    return ((x + m - 1) // m) * m


def _vmem_capacity_bytes():
    """Per-TensorCore VMEM (v5e/v6e: 128 MiB, v7x: 64 MiB). Conservative fallback."""
    try:
        return int(pltpu.get_tpu_info().vmem_capacity_bytes)
    except Exception:
        return 64 << 20


def _pick_channel_block(C, max_ck=512):
    """Channel chunk: multiple of 128 dividing C (lane dim of the feature block,
    sublane dim of the weight block); full C if it is not 128-aligned."""
    if C % _LANE != 0:
        return C
    ck = min(max_ck, C)
    ck -= ck % _LANE
    while ck >= _LANE:
        if C % ck == 0:
            return ck
        ck -= _LANE
    return C


def _pick_batch_block(B, HW, cK, Ep, feat_itemsize, vmem_bytes):
    """Largest batch tile (multiple of 8 dividing B, or B itself for tiny batches) whose
    lane/sublane-padded, double-buffered footprint fits a conservative VMEM budget.
    Prefers >=2 batch-grid steps so the "parallel" axis can shard across v7x's 2 TCs."""
    padded_hw = _round_up(HW, _SUBLANE)
    per_row_feat = 2 * padded_hw * _round_up(cK, _LANE) * feat_itemsize  # 2x = double buffer
    fixed = 2 * _round_up(cK, _SUBLANE) * Ep * 4          # weight chunk, double-buffered
    fixed += 2 * _SUBLANE * Ep * 4                        # bias
    budget = int(vmem_bytes * 0.6) - fixed                # headroom for out/acc/compiler scratch

    cands = [bb for bb in range(_SUBLANE, B + 1, _SUBLANE) if B % bb == 0]
    if not cands:
        return B                                          # tiny batch: one full-batch block
    multi = [bb for bb in cands if B // bb >= 2]
    if multi:
        cands = multi
    for bb in sorted(cands, reverse=True):
        per_out = 3 * _round_up(bb, _SUBLANE) * Ep * 4    # out (x2) + acc scratch
        if bb * per_row_feat + per_out <= budget:
            return bb
    return min(cands)


def _encoder_head_kernel(feat_ref, w_ref, b_ref, o_ref, acc_ref, *, inv_hw):
    """Grid = (batch tiles [parallel], channel chunks [arbitrary, last]).

    feat_ref : [bB, HW, cK]  channels-last feature chunk
    w_ref    : [cK, Ep]      encoding.weight.T chunk (E padded to lane-dense Ep)
    b_ref    : [1, Ep]       encoding.bias (pinned)
    o_ref    : [bB, Ep]      output tile (resident across the channel axis)
    acc_ref  : [bB, Ep] f32  VMEM accumulator scratch
    """
    k = pl.program_id(1)

    @pl.when(k == 0)
    def _():
        acc_ref[...] = jnp.zeros_like(acc_ref)

    # Sum-pool this channel chunk over the spatial (sublane) axis: cheap VPU adds with f32
    # accumulation — no full-tile up-cast of the (possibly bf16) feature block.
    pooled = jnp.sum(feat_ref[...], axis=1, dtype=jnp.float32)            # [bB, cK]
    # Partial Linear contraction on the MXU, accumulated in f32.
    acc_ref[...] += jnp.dot(pooled, w_ref[...].astype(jnp.float32),
                            preferred_element_type=jnp.float32)           # [bB, Ep]

    @pl.when(k == pl.num_programs(1) - 1)
    def _():
        # mean = sum * (1/HW); fold the scale into the finalize step.
        # Dropout: eval-mode identity (see TODO at top).
        o_ref[...] = (acc_ref[...] * inv_hw
                      + b_ref[...].astype(jnp.float32)).astype(o_ref.dtype)


@functools.partial(jax.jit,
                   static_argnames=("bB", "cK", "Ep", "vmem_limit_bytes"))
def _encoder_head_call(features_nchw, weight, bias, *, bB, cK, Ep, vmem_limit_bytes):
    B, C, H, W = features_nchw.shape
    E = weight.shape[0]
    HW = H * W

    # Channels-last for the kernel: [B, HW, C].  Ideally the backbone emits NHWC and this
    # is a no-op; otherwise it is a single wrapper transpose (fused into the jit).
    feat = jnp.transpose(features_nchw.reshape(B, C, HW), (0, 2, 1))       # [B, HW, C]

    # Lane-dense weight / bias / output slabs (E padded up to a multiple of 128).
    if Ep != E:
        w_t = jnp.zeros((C, Ep), dtype=weight.dtype).at[:, :E].set(weight.T)
        b2 = jnp.zeros((1, Ep), dtype=bias.dtype).at[0, :E].set(bias)
    else:
        w_t = weight.T
        b2 = bias.reshape(1, Ep)

    grid = (B // bB, C // cK)

    out_padded = pl.pallas_call(
        functools.partial(_encoder_head_kernel, inv_hw=1.0 / HW),
        out_shape=jax.ShapeDtypeStruct((B, Ep), features_nchw.dtype),
        grid_spec=pltpu.PrefetchScalarGridSpec(
            num_scalar_prefetch=0,
            grid=grid,
            in_specs=[
                pl.BlockSpec((bB, HW, cK), lambda b, k: (b, 0, k)),  # feature chunk
                pl.BlockSpec((cK, Ep), lambda b, k: (k, 0)),         # weight chunk
                pl.BlockSpec((1, Ep), lambda b, k: (0, 0)),          # bias (pinned, tiny)
            ],
            out_specs=pl.BlockSpec((bB, Ep), lambda b, k: (b, 0)),
            scratch_shapes=[pltpu.VMEM((bB, Ep), jnp.float32)],
        ),
        compiler_params=pltpu.CompilerParams(
            # batch axis shards across TensorCores (v7x); channel axis is the reduction.
            dimension_semantics=("parallel", "arbitrary"),
            vmem_limit_bytes=vmem_limit_bytes,
        ),
    )(feat, w_t, b2)

    return out_padded[:, :E]


def encoder_cnn_head(features_nchw, weight, bias):
    """Backbone features -> AdaptiveAvgPool2d(1) -> flatten -> (eval) Dropout -> Linear.

    features_nchw : [B, C, H, W]  (PyTorch NCHW feature map, C == 2048 for ResNet-101)
    weight        : [E, C]        (nn.Linear weight, PyTorch convention)
    bias          : [E]
    returns       : [B, E]
    """
    B, C, H, W = features_nchw.shape
    E = weight.shape[0]
    HW = H * W
    Ep = _round_up(max(E, _LANE), _LANE)

    vmem_bytes = _vmem_capacity_bytes()
    cK = _pick_channel_block(C)
    bB = _pick_batch_block(B, HW, cK, Ep, features_nchw.dtype.itemsize, vmem_bytes)
    vmem_limit = int(min(vmem_bytes * 3 // 4, 96 << 20))

    return _encoder_head_call(features_nchw, weight, bias,
                              bB=bB, cK=cK, Ep=Ep, vmem_limit_bytes=vmem_limit)


if __name__ == "__main__":
    key = jax.random.PRNGKey(0)
    k_feat, k_w = jax.random.split(key)

    # Shapes implied by the module: ResNet-101 feature map for 224x224 input is
    # [B, 2048, 7, 7]; Linear(2048, embed_size).  Small batch / embed for the demo.
    B, C, H, W = 2, 2048, 7, 7
    embed_size = 32

    features = jax.random.normal(k_feat, (B, C, H, W), dtype=jnp.float32)

    # init_weights(): encoding.weight ~ U(-0.1, 0.1), encoding.bias = 0.
    weight = jax.random.uniform(k_w, (embed_size, C), minval=-0.1, maxval=0.1,
                                dtype=jnp.float32)
    bias = jnp.zeros((embed_size,), dtype=jnp.float32)

    out = encoder_cnn_head(features, weight, bias)
    out = jax.block_until_ready(out)

    # Pure-JAX reference: adaptive_pool(1) -> flatten -> (eval) dropout -> linear.
    pooled_ref = jnp.mean(features, axis=(2, 3))              # [B, C]
    ref = pooled_ref @ weight.T + bias                        # [B, E]
    assert out.shape == (B, embed_size)
    assert jnp.allclose(out, ref, rtol=1e-4, atol=1e-4), "mismatch vs reference"

    print("KERNEL_OK")
</pallas_src>

<mosaic_0001>
module attributes {stable_mosaic.version = 11 : i64} {
  func.func @_encoder_head_kernel(%arg0: i32, %arg1: i32, %arg2: memref<2x49x512xf32, #tpu.memory_space<vmem>>, %arg3: memref<512x128xf32, #tpu.memory_space<vmem>>, %arg4: memref<1x128xf32, #tpu.memory_space<vmem>>, %arg5: memref<2x128xf32, #tpu.memory_space<vmem>>, %arg6: memref<2x128xf32, #tpu.memory_space<vmem>>) attributes {dimension_semantics = [#tpu.dimension_semantics<parallel>, #tpu.dimension_semantics<arbitrary>], iteration_bounds = array<i64: 1, 4>, scalar_prefetch = 0 : i64, scratch_operands = 1 : i64, tpu.core_type = #tpu.core_type<tc>, window_params = [{transform_indices = @transform_0, window_bounds = array<i64: 2, 49, 512>}, {transform_indices = @transform_1, window_bounds = array<i64: 512, 128>}, {pipeline_mode = #tpu.pipeline_mode<synchronous>, transform_indices = @transform_2, window_bounds = array<i64: 1, 128>}, {transform_indices = @transform_3, window_bounds = array<i64: 2, 128>}]} {
    %c0_i32 = arith.constant 0 : i32
    %0 = arith.cmpi eq, %arg1, %c0_i32 : i32
    %1 = arith.extui %0 : i1 to i32
    %c0_i32_0 = arith.constant 0 : i32
    %2 = arith.cmpi ne, %1, %c0_i32_0 : i32
    scf.if %2 {
      %cst_11 = arith.constant 0.000000e+00 : f32
      %13 = vector.broadcast %cst_11 : f32 to vector<2x128xf32>
      %c0_12 = arith.constant 0 : index
      %c0_13 = arith.constant 0 : index
      %14 = vector.load %arg6[%c0_12, %c0_13] : memref<2x128xf32, #tpu.memory_space<vmem>>, vector<2x128xf32>
      tpu.vector_store %arg6[%c0_12, %c0_13], %13 {strides = array<i32>} : memref<2x128xf32, #tpu.memory_space<vmem>>, vector<2x128xf32>,
    } else {
    }
    %c0 = arith.constant 0 : index
    %c0_1 = arith.constant 0 : index
    %c0_2 = arith.constant 0 : index
    %3 = vector.load %arg2[%c0, %c0_1, %c0_2] : memref<2x49x512xf32, #tpu.memory_space<vmem>>, vector<2x49x512xf32>
    %cst = arith.constant dense<0.000000e+00> : vector<2x512xf32>
    %4 = vector.multi_reduction <add>, %3, %cst [1] : vector<2x49x512xf32> to vector<2x512xf32>
    %c0_3 = arith.constant 0 : index
    %c0_4 = arith.constant 0 : index
    %5 = vector.load %arg6[%c0_3, %c0_4] : memref<2x128xf32, #tpu.memory_space<vmem>>, vector<2x128xf32>
    %c0_5 = arith.constant 0 : index
    %c0_6 = arith.constant 0 : index
    %6 = vector.load %arg3[%c0_5, %c0_6] : memref<512x128xf32, #tpu.memory_space<vmem>>, vector<512x128xf32>
    %cst_7 = arith.constant dense<0.000000e+00> : vector<2x128xf32>
    %7 = tpu.matmul %4, %6, %cst_7 {dimension_numbers = #tpu.dot_dimension_numbers<[1], [0], [0], [1], [0, 0, 1, 1], [], []>} : vector<2x512xf32>, vector<512x128xf32>, vector<2x128xf32> -> vector<2x128xf32>
    %8 = arith.addf %5, %7 : vector<2x128xf32>
    %c0_8 = arith.constant 0 : index
    %c0_9 = arith.constant 0 : index
    %9 = vector.load %arg6[%c0_8, %c0_9] : memref<2x128xf32, #tpu.memory_space<vmem>>, vector<2x128xf32>
    tpu.vector_store %arg6[%c0_8, %c0_9], %8 {strides = array<i32>} : memref<2x128xf32, #tpu.memory_space<vmem>>, vector<2x128xf32>,
    %c3_i32 = arith.constant 3 : i32
    %10 = arith.cmpi eq, %arg1, %c3_i32 : i32
    %11 = arith.extui %10 : i1 to i32
    %c0_i32_10 = arith.constant 0 : i32
    %12 = arith.cmpi ne, %11, %c0_i32_10 : i32
    scf.if %12 {
      %c0_11 = arith.constant 0 : index
      %c0_12 = arith.constant 0 : index
      %13 = vector.load %arg6[%c0_11, %c0_12] : memref<2x128xf32, #tpu.memory_space<vmem>>, vector<2x128xf32>
      %cst_13 = arith.constant 0.0204081628 : f32
      %14 = vector.broadcast %cst_13 : f32 to vector<2x128xf32>
      %15 = arith.mulf %13, %14 : vector<2x128xf32>
      %c0_14 = arith.constant 0 : index
      %c0_15 = arith.constant 0 : index
      %16 = vector.load %arg4[%c0_14, %c0_15] : memref<1x128xf32, #tpu.memory_space<vmem>>, vector<1x128xf32>
      %17 = vector.broadcast %16 : vector<1x128xf32> to vector<2x128xf32>
      %18 = arith.addf %15, %17 : vector<2x128xf32>
      %c0_16 = arith.constant 0 : index
      %c0_17 = arith.constant 0 : index
      %19 = vector.load %arg5[%c0_16, %c0_17] : memref<2x128xf32, #tpu.memory_space<vmem>>, vector<2x128xf32>
      tpu.vector_store %arg5[%c0_16, %c0_17], %18 {strides = array<i32>} : memref<2x128xf32, #tpu.memory_space<vmem>>, vector<2x128xf32>,
    } else {
    }
    return
  }
  func.func @transform_0(%arg0: i32, %arg1: i32) -> (i32, i32, i32) {
    %c0_i32 = arith.constant 0 : i32
    %c0_i32_0 = arith.constant 0 : i32
    return %arg0, %c0_i32, %arg1 : i32, i32, i32
  }
  func.func @transform_1(%arg0: i32, %arg1: i32) -> (i32, i32) {
    %c0_i32 = arith.constant 0 : i32
    %c0_i32_0 = arith.constant 0 : i32
    return %arg1, %c0_i32 : i32, i32
  }
  func.func @transform_2(%arg0: i32, %arg1: i32) -> (i32, i32) {
    %c0_i32 = arith.constant 0 : i32
    %c0_i32_0 = arith.constant 0 : i32
    %c0_i32_1 = arith.constant 0 : i32
    return %c0_i32, %c0_i32_0 : i32, i32
  }
  func.func @transform_3(%arg0: i32, %arg1: i32) -> (i32, i32) {
    %c0_i32 = arith.constant 0 : i32
    %c0_i32_0 = arith.constant 0 : i32
    return %arg0, %c0_i32 : i32, i32
  }
}

</mosaic_0001>

<llo_original>
// kernel: _encoder_head_call.1
$region0: #{_encoder_head_call.1}
  #allocation0 [shape = 'u32[]', space=smem, size = 0x4, offset = 0x4, fixed_abs, tag = 'smem constant byte address 0x4 - core index']
  #allocation1 [shape = 'u32[144,128]{1,0:T(1,128)}', space=vmem, size = 0x12000, scoped, tag = 'internal scratch']
  #allocation2 [shape = 'f32[2,128]{1,0:T(2,128)}', space=vmem, size = 0x400, scoped, tag = 'scratch operand']
  %s0 = inlined_call_operand.vmem [shape: f32[2,49,2048], index: 0, kind: input, shape index: {}]
  %s1 = inlined_call_operand.vmem [shape: f32[2048,128], index: 1, kind: input, shape index: {}]
  %s2 = inlined_call_operand.vmem [shape: f32[1,128], index: 2, kind: input, shape index: {}]
  %s3 = inlined_call_operand.hbm [shape: f32[2,128], index: 3, kind: output, shape index: {}]
  %s4 = sld [smem:[#allocation0]]
  $region76: #{_encoder_head_call.1} parent=0
    _
  %s6 = ssub.s32 1, %s4
  %s7 = scalar_select 0, %s6, %s4
  $region1: #{_encoder_head_call.1} parent=0
    #allocation3 [shape = 'u8[458752]{0}', space=vmem, size = 0x70000, scoped, tag = 'input window, operand 0']
    #allocation4 [shape = 'u8[1024]{0}', space=vmem, size = 0x400, scoped, tag = 'output window, operand 0, single buffered']
    #allocation5 [shape = 's32[2]{0}', space=sflag, size = 0x8, scoped, tag = 'scoped memory for _encoder_head_call.1']
    %8 = vsyncpa [#allocation5], 0
    loop: start=0, step=1, limit=6
    $region2: #{_encoder_head_call.1} parent=1 // loop_pre_header
      _
    $region3: #{_encoder_head_call.1} parent=1 // loop_header
      %s10 = sphi 0, %s14
      %p11 = scmp.ge.s32.totalorder %s10, 6
      %s17 = sphi 0, %s29
      %s18 = sphi 0, %s25
      %s19 = sphi 0, %s17
      %s20 = sphi 0, %s18
      %s21 = sphi 0, %s19
      %s22 = sphi 0, %s20
      %s34 = sphi 0, %s36
      %s37 = sphi 0, %s34
      %s38 = sphi 0, %s37
      %s54 = sphi 0, %s38
      %s60 = sphi 0, %s62
      %s63 = sphi 0, %s60
      %s64 = sphi 0, %s63
      %s80 = sphi 0, %s64
      %s84 = sphi 0, %s84
      %s86 = sphi 0, %s84
      %s87 = sphi 0, %s86
      %s101 = sphi 0, %s87
      %s107 = sphi 0, %s109
      %s110 = sphi 0, %s107
      %s111 = sphi 0, %s110
      %s127 = sphi 0, %s111
    $region4: #{_encoder_head_call.1} parent=1 // loop_header_branch
      %13 = sbr.rel (%p11) target = $region8
    $region5: #{_encoder_head_call.1} parent=1 // loop_body
      %s15 = ssub.s32 %s10, 1
      %s16 = ssub.s32 %s10, 2
      %s23 = sadd.s32 1, %s18
      %p24 = scmp.ge.s32.totalorder %s23, 4
      %s25 = scalar_select %p24, 0, %s23
      %s26 = sadd.s32 1, %s17
      %s27 = scalar_select %p24, %s26, %s17
      %p28 = scmp.ge.s32.totalorder %s27, 1
      %s29 = scalar_select %p28, 0, %s27
      %s30 = ssub.s32 %s17, %s29
      %s31 = ssub.s32 %s18, %s25
      %s32 = sor.u32 %s30, %s31
      %p33 = scmp.eq.s32.totalorder %s32, 0
      %s35 = sadd.s32 %s34, 1
      %s36 = scalar_select %p33, %s34, %s35
      %p39 = pneg %p33
      %p40 = scmp.eq.s32.totalorder %s10, 3
      %p41 = por %p39, %p40
      %p42 = scmp.ne.s32.totalorder %s34, %s37
      %p43 = scmp.eq.s32.totalorder %s10, 0
      %p44 = por %p42, %p43
      %p45 = scmp.ne.s32.totalorder %s34, %s37
      %p46 = scmp.eq.s32.totalorder %s15, 3
      %p47 = por %p45, %p46
      %p48 = scmp.ne.s32.totalorder %s37, %s38
      %p49 = scmp.eq.s32.totalorder %s15, 0
      %p50 = por %p48, %p49
      %p51 = scmp.ne.s32.totalorder %s37, %s38
      %p52 = scmp.eq.s32.totalorder %s16, 3
      %p53 = por %p51, %p52
      %p55 = scmp.ne.s32.totalorder %s38, %s54
      %p56 = scmp.eq.s32.totalorder %s16, 0
      %p57 = por %p55, %p56
      %s58 = ssub.s32 %s18, %s25
      %p59 = scmp.eq.s32.totalorder %s58, 0
      %s61 = sadd.s32 %s60, 1
      %s62 = scalar_select %p59, %s60, %s61
      %p65 = pneg %p59
      %p66 = scmp.eq.s32.totalorder %s10, 3
      %p67 = por %p65, %p66
      %p68 = scmp.ne.s32.totalorder %s60, %s63
      %p69 = scmp.eq.s32.totalorder %s10, 0
      %p70 = por %p68, %p69
      %p71 = scmp.ne.s32.totalorder %s60, %s63
      %p72 = scmp.eq.s32.totalorder %s15, 3
      %p73 = por %p71, %p72
      %p74 = scmp.ne.s32.totalorder %s63, %s64
      %p75 = scmp.eq.s32.totalorder %s15, 0
      %p76 = por %p74, %p75
      %p77 = scmp.ne.s32.totalorder %s63, %s64
      %p78 = scmp.eq.s32.totalorder %s16, 3
      %p79 = por %p77, %p78
      %p81 = scmp.ne.s32.totalorder %s64, %s80
      %p82 = scmp.eq.s32.totalorder %s16, 0
      %p83 = por %p81, %p82
      %s85 = sadd.s32 %s84, 1
      %p88 = scmp.eq.s32.totalorder %s10, 3
      %p89 = scmp.ne.s32.totalorder %s84, %s86
      %p90 = scmp.eq.s32.totalorder %s10, 0
      %p91 = por %p89, %p90
      %p92 = scmp.ne.s32.totalorder %s84, %s86
      %p93 = scmp.eq.s32.totalorder %s15, 3
      %p94 = por %p92, %p93
      %p95 = scmp.ne.s32.totalorder %s86, %s87
      %p96 = scmp.eq.s32.totalorder %s15, 0
      %p97 = por %p95, %p96
      %p98 = scmp.ne.s32.totalorder %s86, %s87
      %p99 = scmp.eq.s32.totalorder %s16, 3
      %p100 = por %p98, %p99
      %p102 = scmp.ne.s32.totalorder %s87, %s101
      %p103 = scmp.eq.s32.totalorder %s16, 0
      %p104 = por %p102, %p103
      %s105 = ssub.s32 %s17, %s29
      %p106 = scmp.eq.s32.totalorder %s105, 0
      %s108 = sadd.s32 %s107, 1
      %s109 = scalar_select %p106, %s107, %s108
      %p112 = pneg %p106
      %p113 = scmp.eq.s32.totalorder %s10, 3
      %p114 = por %p112, %p113
      %p115 = scmp.ne.s32.totalorder %s107, %s110
      %p116 = scmp.eq.s32.totalorder %s10, 0
      %p117 = por %p115, %p116
      %p118 = scmp.ne.s32.totalorder %s107, %s110
      %p119 = scmp.eq.s32.totalorder %s15, 3
      %p120 = por %p118, %p119
      %p121 = scmp.ne.s32.totalorder %s110, %s111
      %p122 = scmp.eq.s32.totalorder %s15, 0
      %p123 = por %p121, %p122
      %p124 = scmp.ne.s32.totalorder %s110, %s111
      %p125 = scmp.eq.s32.totalorder %s16, 3
      %p126 = por %p124, %p125
      %p128 = scmp.ne.s32.totalorder %s111, %s127
      %p129 = scmp.eq.s32.totalorder %s16, 0
      %p130 = por %p128, %p129
      %p131 = scmp.le.s32.totalorder 1, %s10
      %p132 = scmp.lt.s32.totalorder %s10, 5
      %p133 = pnand %p131, %p132
      %p134 = pneg %p133
      // Predicated region
      $region9: #{_encoder_head_call.1} parent=5 // pred_check
        _
      $region10: #{_encoder_head_call.1} parent=5 // pred_check_branch
        %136 = sbr.rel (%p133) target = $region12
      $region11: #{_encoder_head_call.1} parent=5 // pred_region
        %s137 = ssub.s32 %s10, 1
        // Predicated region
        $region13: #{_encoder_head_call.1} parent=11 // pred_check
          %p138 = pneg %p97
        $region14: #{_encoder_head_call.1} parent=11 // pred_check_branch
          %140 = sbr.rel (%p138) target = $region16
        $region15: #{_encoder_head_call.1} parent=11 // pred_region
          _
        $region16: #{_encoder_head_call.1} parent=11 // pred_fallthru
          _
      $region12: #{_encoder_head_call.1} parent=5 // pred_fallthru
        _
      %p141 = scmp.lt.s32.totalorder %s10, 4
      // Predicated region
      $region17: #{_encoder_head_call.1} parent=5 // pred_check
        %p142 = pneg %p141
      $region18: #{_encoder_head_call.1} parent=5 // pred_check_branch
        %144 = sbr.rel (%p142) target = $region20
      $region19: #{_encoder_head_call.1} parent=5 // pred_region
        // Predicated region
        $region21: #{_encoder_head_call.1} parent=19 // pred_check
          %p145 = pneg %p44
        $region22: #{_encoder_head_call.1} parent=19 // pred_check_branch
          %147 = sbr.rel (%p145) target = $region24
        $region23: #{_encoder_head_call.1} parent=19 // pred_region
          %s148 = sand.u32 %s34, 1
          %s149 = sand.u32 %s34, 1
          %s150 = smul.addr %s149, 448
          %s151 = scalar_lea.vmem [#allocation3], %s150
          %s152 = smul.u32 2, %s17
          %s153 = smul.u32 4, %s18
          %s154 = smul.addr %s152, 112
          %s155 = sadd.s32 %s153, %s154
          %s156 = smul.addr %s155, 8
          %s157 = scalar_lea.vmem %s0, %s156
          // Predicated region
          $region25: #{_encoder_head_call.1} parent=23 // pred_check
            _
          $region26: #{_encoder_head_call.1} parent=23 // pred_check_branch
            %159 = sbr.rel (0) target = $region28
          $region27: #{_encoder_head_call.1} parent=23 // pred_region
            // Predicated region
            $region29: #{_encoder_head_call.1} parent=27 // pred_check
              _
            $region30: #{_encoder_head_call.1} parent=27 // pred_check_branch
              %161 = sbr.rel (0) target = $region32
            $region31: #{_encoder_head_call.1} parent=27 // pred_region
              loop: start=0, step=1, limit=1
              $region33: #{_encoder_head_call.1} parent=31 // loop_pre_header
                _
              $region34: #{_encoder_head_call.1} parent=31 // loop_header
                %s163 = sphi 0, %s167
                %p164 = scmp.ge.s32.totalorder %s163, 1
                %s168 = sphi %s157, %s157
                %s169 = sphi %s151, %s151
              $region35: #{_encoder_head_call.1} parent=31 // loop_header_branch
                %166 = sbr.rel (%p164) target = $region39
              $region36: #{_encoder_head_call.1} parent=31 // loop_body
                %v170 = vld [vmem:[%s168] sm:$0xff]
                %171 = vst [vmem:[%s169] sm:$0xff] %v170
                %v172 = vld [vmem:[%s168 + $0x8] sm:$0xff]
                %173 = vst [vmem:[%s169 + $0x8] sm:$0xff] %v172
                %v174 = vld [vmem:[%s168 + $0x10] sm:$0xff]
                %175 = vst [vmem:[%s169 + $0x10] sm:$0xff] %v174
                %v176 = vld [vmem:[%s168 + $0x18] sm:$0xff]
                %177 = vst [vmem:[%s169 + $0x18] sm:$0xff] %v176
                %v178 = vld [vmem:[%s168 + $0x80] sm:$0xff]
                %179 = vst [vmem:[%s169 + $0x20] sm:$0xff] %v178
                %v180 = vld [vmem:[%s168 + $0x88] sm:$0xff]
                %181 = vst [vmem:[%s169 + $0x28] sm:$0xff] %v180
                %v182 = vld [vmem:[%s168 + $0x90] sm:$0xff]
                %183 = vst [vmem:[%s169 + $0x30] sm:$0xff] %v182
                %v184 = vld [vmem:[%s168 + $0x98] sm:$0xff]
                %185 = vst [vmem:[%s169 + $0x38] sm:$0xff] %v184
                %v186 = vld [vmem:[%s168 + $0x100] sm:$0xff]
                %187 = vst [vmem:[%s169 + $0x40] sm:$0xff] %v186
                %v188 = vld [vmem:[%s168 + $0x108] sm:$0xff]
                %189 = vst [vmem:[%s169 + $0x48] sm:$0xff] %v188
                %v190 = vld [vmem:[%s168 + $0x110] sm:$0xff]
                %191 = vst [vmem:[%s169 + $0x50] sm:$0xff] %v190
                %v192 = vld [vmem:[%s168 + $0x118] sm:$0xff]
                %193 = vst [vmem:[%s169 + $0x58] sm:$0xff] %v192
                %v194 = vld [vmem:[%s168 + $0x180] sm:$0xff]
                %195 = vst [vmem:[%s169 + $0x60] sm:$0xff] %v194
                %v196 = vld [vmem:[%s168 + $0x188] sm:$0xff]
                %197 = vst [vmem:[%s169 + $0x68] sm:$0xff] %v196
                %v198 = vld [vmem:[%s168 + $0x190] sm:$0xff]
                %199 = vst [vmem:[%s169 + $0x70] sm:$0xff] %v198
                %v200 = vld [vmem:[%s168 + $0x198] sm:$0xff]
                %201 = vst [vmem:[%s169 + $0x78] sm:$0xff] %v200
                %v202 = vld [vmem:[%s168 + $0x200] sm:$0xff]
                %203 = vst [vmem:[%s169 + $0x80] sm:$0xff] %v202
                %v204 = vld [vmem:[%s168 + $0x208] sm:$0xff]
                %205 = vst [vmem:[%s169 + $0x88] sm:$0xff] %v204
                %v206 = vld [vmem:[%s168 + $0x210] sm:$0xff]
                %207 = vst [vmem:[%s169 + $0x90] sm:$0xff] %v206
                %v208 = vld [vmem:[%s168 + $0x218] sm:$0xff]
                %209 = vst [vmem:[%s169 + $0x98] sm:$0xff] %v208
                %v210 = vld [vmem:[%s168 + $0x280] sm:$0xff]
                %211 = vst [vmem:[%s169 + $0xa0] sm:$0xff] %v210
                %v212 = vld [vmem:[%s168 + $0x288] sm:$0xff]
                %213 = vst [vmem:[%s169 + $0xa8] sm:$0xff] %v212
                %v214 = vld [vmem:[%s168 + $0x290] sm:$0xff]
                %215 = vst [vmem:[%s169 + $0xb0] sm:$0xff] %v214
                %v216 = vld [vmem:[%s168 + $0x298] sm:$0xff]
                %217 = vst [vmem:[%s169 + $0xb8] sm:$0xff] %v216
                %v218 = vld [vmem:[%s168 + $0x300] sm:$0xff]
                %219 = vst [vmem:[%s169 + $0xc0] sm:$0xff] %v218
                %v220 = vld [vmem:[%s168 + $0x308] sm:$0xff]
                %221 = vst [vmem:[%s169 + $0xc8] sm:$0xff] %v220
                %v222 = vld [vmem:[%s168 + $0x310] sm:$0xff]
                %223 = vst [vmem:[%s169 + $0xd0] sm:$0xff] %v222
                %v224 = vld [vmem:[%s168 + $0x318] sm:$0xff]
                %225 = vst [vmem:[%s169 + $0xd8] sm:$0xff] %v224
                %v226 = vld [vmem:[%s168 + $0x380] sm:$0xff]
                %227 = vst [vmem:[%s169 + $0xe0] sm:$0xff] %v226
                %v228 = vld [vmem:[%s168 + $0x388] sm:$0xff]
                %229 = vst [vmem:[%s169 + $0xe8] sm:$0xff] %v228
                %v230 = vld [vmem:[%s168 + $0x390] sm:$0xff]
                %231 = vst [vmem:[%s169 + $0xf0] sm:$0xff] %v230
                %v232 = vld [vmem:[%s168 + $0x398] sm:$0xff]
                %233 = vst [vmem:[%s169 + $0xf8] sm:$0xff] %v232
                %v234 = vld [vmem:[%s168 + $0x400] sm:$0xff]
                %235 = vst [vmem:[%s169 + $0x100] sm:$0xff] %v234
                %v236 = vld [vmem:[%s168 + $0x408] sm:$0xff]
                %237 = vst [vmem:[%s169 + $0x108] sm:$0xff] %v236
                %v238 = vld [vmem:[%s168 + $0x410] sm:$0xff]
                %239 = vst [vmem:[%s169 + $0x110] sm:$0xff] %v238
                %v240 = vld [vmem:[%s168 + $0x418] sm:$0xff]
                %241 = vst [vmem:[%s169 + $0x118] sm:$0xff] %v240
                %v242 = vld [vmem:[%s168 + $0x480] sm:$0xff]
                %243 = vst [vmem:[%s169 + $0x120] sm:$0xff] %v242
                %v244 = vld [vmem:[%s168 + $0x488] sm:$0xff]
                %245 = vst [vmem:[%s169 + $0x128] sm:$0xff] %v244
                %v246 = vld [vmem:[%s168 + $0x490] sm:$0xff]
                %247 = vst [vmem:[%s169 + $0x130] sm:$0xff] %v246
                %v248 = vld [vmem:[%s168 + $0x498] sm:$0xff]
                %249 = vst [vmem:[%s169 + $0x138] sm:$0xff] %v248
                %v250 = vld [vmem:[%s168 + $0x500] sm:$0xff]
                %251 = vst [vmem:[%s169 + $0x140] sm:$0xff] %v250
                %v252 = vld [vmem:[%s168 + $0x508] sm:$0xff]
                %253 = vst [vmem:[%s169 + $0x148] sm:$0xff] %v252
                %v254 = vld [vmem:[%s168 + $0x510] sm:$0xff]
                %255 = vst [vmem:[%s169 + $0x150] sm:$0xff] %v254
                %v256 = vld [vmem:[%s168 + $0x518] sm:$0xff]
                %257 = vst [vmem:[%s169 + $0x158] sm:$0xff] %v256
                %v258 = vld [vmem:[%s168 + $0x580] sm:$0xff]
                %259 = vst [vmem:[%s169 + $0x160] sm:$0xff] %v258
                %v260 = vld [vmem:[%s168 + $0x588] sm:$0xff]
                %261 = vst [vmem:[%s169 + $0x168] sm:$0xff] %v260
                %v262 = vld [vmem:[%s168 + $0x590] sm:$0xff]
                %263 = vst [vmem:[%s169 + $0x170] sm:$0xff] %v262
                %v264 = vld [vmem:[%s168 + $0x598] sm:$0xff]
                %265 = vst [vmem:[%s169 + $0x178] sm:$0xff] %v264
                %v266 = vld [vmem:[%s168 + $0x600] sm:$0xff]
                %267 = vst [vmem:[%s169 + $0x180] sm:$0xff] %v266
                %v268 = vld [vmem:[%s168 + $0x608] sm:$0xff]
                %269 = vst [vmem:[%s169 + $0x188] sm:$0xff] %v268
                %v270 = vld [vmem:[%s168 + $0x610] sm:$0xff]
                %271 = vst [vmem:[%s169 + $0x190] sm:$0xff] %v270
                %v272 = vld [vmem:[%s168 + $0x618] sm:$0xff]
                %273 = vst [vmem:[%s169 + $0x198] sm:$0xff] %v272
                %v274 = vld [vmem:[%s168 + $0x680] sm:$0xff]
                %275 = vst [vmem:[%s169 + $0x1a0] sm:$0xff] %v274
                %v276 = vld [vmem:[%s168 + $0x688] sm:$0xff]
                %277 = vst [vmem:[%s169 + $0x1a8] sm:$0xff] %v276
                %v278 = vld [vmem:[%s168 + $0x690] sm:$0xff]
                %279 = vst [vmem:[%s169 + $0x1b0] sm:$0xff] %v278
                %v280 = vld [vmem:[%s168 + $0x698] sm:$0xff]
                %281 = vst [vmem:[%s169 + $0x1b8] sm:$0xff] %v280
              $region37: #{_encoder_head_call.1} parent=31 // loop_footer
                %s167 = sadd.s32 1, %s163
              $region38: #{_encoder_head_call.1} parent=31 // loop_footer_branch
                %162 = sbr.rel target = $region34
              $region39: #{_encoder_head_call.1} parent=31 // loop_exit
                _
            $region32: #{_encoder_head_call.1} parent=27 // pred_fallthru
              _
            // Predicated region
            $region40: #{_encoder_head_call.1} parent=27 // pred_check
              _
            $region41: #{_encoder_head_call.1} parent=27 // pred_check_branch
              %283 = sbr.rel target = $region43
            $region42: #{_encoder_head_call.1} parent=27 // pred_region
              _
            $region43: #{_encoder_head_call.1} parent=27 // pred_fallthru
              _
          $region28: #{_encoder_head_call.1} parent=23 // pred_fallthru
            _
          %284 = vnop
        $region24: #{_encoder_head_call.1} parent=19 // pred_fallthru
          _
        // Predicated region
        $region44: #{_encoder_head_call.1} parent=19 // pred_check
          %p285 = pneg %p70
        $region45: #{_encoder_head_call.1} parent=19 // pred_check_branch
          %287 = sbr.rel (%p285) target = $region47
        $region46: #{_encoder_head_call.1} parent=19 // pred_region
          %s288 = smul.u32 64, %s18
          %p289 = scmp.lt.s32.totalorder %s288, 255
          %s290 = scalar_select %p289, %s288, 255
          %s291 = smul.addr %s290, 8
          %s292 = scalar_lea.vmem %s1, %s291
          %s293 = smul.u32 64, %s18
        $region47: #{_encoder_head_call.1} parent=19 // pred_fallthru
          _
      $region20: #{_encoder_head_call.1} parent=5 // pred_fallthru
        _
      %p294 = scmp.le.s32.totalorder 1, %s10
      %p295 = scmp.lt.s32.totalorder %s10, 5
      %p296 = pnand %p294, %p295
      %p297 = pneg %p296
      // Predicated region
      $region48: #{_encoder_head_call.1} parent=5 // pred_check
        _
      $region49: #{_encoder_head_call.1} parent=5 // pred_check_branch
        %299 = sbr.rel (%p296) target = $region51
      $region50: #{_encoder_head_call.1} parent=5 // pred_region
        %s300 = ssub.s32 %s10, 1
        %s301 = sand.u32 %s37, 1
        %s302 = sand.u32 %s37, 1
        %s303 = smul.addr %s302, 448
        %s304 = scalar_lea.vmem [#allocation3], %s303
        // Predicated region
        $region52: #{_encoder_head_call.1} parent=50 // pred_check
          %p305 = pneg %p50
        $region53: #{_encoder_head_call.1} parent=50 // pred_check_branch
          %307 = sbr.rel (%p305) target = $region55
        $region54: #{_encoder_head_call.1} parent=50 // pred_region
          _
        $region55: #{_encoder_head_call.1} parent=50 // pred_fallthru
          _
        %s308 = sand.u32 %s37, 1
        %s309 = sand.u32 %s37, 1
        %s310 = smul.addr %s309, 448
        %s311 = scalar_lea.vmem [#allocation3], %s310
        %p312 = pneg %p50
        %p313 = pneg %p47
        %s314 = smul.u32 64, %s20
        %p315 = scmp.lt.s32.totalorder %s314, 255
        %s316 = scalar_select %p315, %s314, 255
        %s317 = smul.addr %s316, 8
        %s318 = scalar_lea.vmem %s1, %s317
        %p319 = pneg %p76
        %p320 = pneg %p73
        %p321 = pneg %p97
        %p322 = pneg %p94
        %p323 = pneg %p123
        %p324 = pneg %p120
        %s325 = smul.u32 2, %s19
        %s326 = smul.u32 4, %s20
        %s327 = smul.u32 64, %s20
        %p328 = scmp.lt.s32.totalorder %s327, 255
        %s329 = scalar_select %p328, %s327, 255
        %s330 = smul.addr %s329, 8
        %s331 = scalar_lea.vmem %s1, %s330
        %s332 = smul.u32 64, %s20
        %p333 = scmp.eq.s32.totalorder %s20, 0
        // Predicated region
        $region56: #{_encoder_head_call.1} parent=50 // pred_check
          %p334 = pneg %p333
        $region57: #{_encoder_head_call.1} parent=50 // pred_check_branch
          %336 = sbr.rel (%p334) target = $region59
        $region58: #{_encoder_head_call.1} parent=50 // pred_region
          %337 = vst [vmem:[#allocation2] sm:$0x3] 0.0
        $region59: #{_encoder_head_call.1} parent=50 // pred_fallthru
          _
        %v338 = vld [vmem:[%s304] sm:$0xff]
        %v339 = vld [vmem:[%s304 + $0x8] sm:$0xff]
        %v340 = vld [vmem:[%s304 + $0x10] sm:$0xff]
        %v341 = vld [vmem:[%s304 + $0x18] sm:$0xff]
        %v342 = vld [vmem:[%s304 + $0x20] sm:$0xff]
        %v343 = vld [vmem:[%s304 + $0x28] sm:$0xff]
        %v344 = vld [vmem:[%s304 + $0x30] sm:$0xff]
        %v345 = vld [vmem:[%s304 + $0x38] sm:$0xff]
        %v346 = vld [vmem:[%s304 + $0x40] sm:$0xff]
        %v347 = vld [vmem:[%s304 + $0x48] sm:$0xff]
        %v348 = vld [vmem:[%s304 + $0x50] sm:$0xff]
        %v349 = vld [vmem:[%s304 + $0x58] sm:$0xff]
        %v350 = vld [vmem:[%s304 + $0x60] sm:$0xff]
        %v351 = vld [vmem:[%s304 + $0x68] sm:$0xff]
        %v352 = vld [vmem:[%s304 + $0x70] sm:$0xff]
        %v353 = vld [vmem:[%s304 + $0x78] sm:$0xff]
        %v354 = vld [vmem:[%s304 + $0x80] sm:$0xff]
        %v355 = vld [vmem:[%s304 + $0x88] sm:$0xff]
        %v356 = vld [vmem:[%s304 + $0x90] sm:$0xff]
        %v357 = vld [vmem:[%s304 + $0x98] sm:$0xff]
        %v358 = vld [vmem:[%s304 + $0xa0] sm:$0xff]
        %v359 = vld [vmem:[%s304 + $0xa8] sm:$0xff]
        %v360 = vld [vmem:[%s304 + $0xb0] sm:$0xff]
        %v361 = vld [vmem:[%s304 + $0xb8] sm:$0xff]
        %v362 = vld [vmem:[%s304 + $0xc0] sm:$0x1]
        %v363 = vld [vmem:[%s304 + $0xc8] sm:$0x1]
        %v364 = vld [vmem:[%s304 + $0xd0] sm:$0x1]
        %v365 = vld [vmem:[%s304 + $0xd8] sm:$0x1]
        %v366 = vld [vmem:[%s304 + $0xe0] sm:$0xff]
        %v367 = vld [vmem:[%s304 + $0xe8] sm:$0xff]
        %v368 = vld [vmem:[%s304 + $0xf0] sm:$0xff]
        %v369 = vld [vmem:[%s304 + $0xf8] sm:$0xff]
        %v370 = vld [vmem:[%s304 + $0x100] sm:$0xff]
        %v371 = vld [vmem:[%s304 + $0x108] sm:$0xff]
        %v372 = vld [vmem:[%s304 + $0x110] sm:$0xff]
        %v373 = vld [vmem:[%s304 + $0x118] sm:$0xff]
        %v374 = vld [vmem:[%s304 + $0x120] sm:$0xff]
        %v375 = vld [vmem:[%s304 + $0x128] sm:$0xff]
        %v376 = vld [vmem:[%s304 + $0x130] sm:$0xff]
        %v377 = vld [vmem:[%s304 + $0x138] sm:$0xff]
        %v378 = vld [vmem:[%s304 + $0x140] sm:$0xff]
        %v379 = vld [vmem:[%s304 + $0x148] sm:$0xff]
        %v380 = vld [vmem:[%s304 + $0x150] sm:$0xff]
        %v381 = vld [vmem:[%s304 + $0x158] sm:$0xff]
        %v382 = vld [vmem:[%s304 + $0x160] sm:$0xff]
        %v383 = vld [vmem:[%s304 + $0x168] sm:$0xff]
        %v384 = vld [vmem:[%s304 + $0x170] sm:$0xff]
        %v385 = vld [vmem:[%s304 + $0x178] sm:$0xff]
        %v386 = vld [vmem:[%s304 + $0x180] sm:$0xff]
        %v387 = vld [vmem:[%s304 + $0x188] sm:$0xff]
        %v388 = vld [vmem:[%s304 + $0x190] sm:$0xff]
        %v389 = vld [vmem:[%s304 + $0x198] sm:$0xff]
        %v390 = vld [vmem:[%s304 + $0x1a0] sm:$0x1]
        %v391 = vld [vmem:[%s304 + $0x1a8] sm:$0x1]
        %v392 = vld [vmem:[%s304 + $0x1b0] sm:$0x1]
        %v393 = vld [vmem:[%s304 + $0x1b8] sm:$0x1]
        %v394 = vadd.f32 %v338, %v342
        %v395 = vadd.f32 %v394, %v346
        %v396 = vadd.f32 %v395, %v350
        %v397 = vadd.f32 %v396, %v354
        %v398 = vadd.f32 %v397, %v358
        %vm399 = vcmask 1040384
        %v400 = vsel %vm399, %v362, 0.0
        %v401 = vadd.f32 %v398, %v400
        %v402 = vrot.slane %v401, 4
        %v403 = vadd.f32 %v401, %v402
        %v404 = vrot.slane %v403, 2
        %v405 = vadd.f32 %v403, %v404
        %v406 = vrot.slane %v405, 1
        %v407 = vadd.f32 %v405, %v406
        %v408 = vadd.f32 %v339, %v343
        %v409 = vadd.f32 %v408, %v347
        %v410 = vadd.f32 %v409, %v351
        %v411 = vadd.f32 %v410, %v355
        %v412 = vadd.f32 %v411, %v359
        %v413 = vsel %vm399, %v363, 0.0
        %v414 = vadd.f32 %v412, %v413
        %v415 = vrot.slane %v414, 4
        %v416 = vadd.f32 %v414, %v415
        %v417 = vrot.slane %v416, 2
        %v418 = vadd.f32 %v416, %v417
        %v419 = vrot.slane %v418, 1
        %v420 = vadd.f32 %v418, %v419
        %v421 = vadd.f32 %v340, %v344
        %v422 = vadd.f32 %v421, %v348
        %v423 = vadd.f32 %v422, %v352
        %v424 = vadd.f32 %v423, %v356
        %v425 = vadd.f32 %v424, %v360
        %v426 = vsel %vm399, %v364, 0.0
        %v427 = vadd.f32 %v425, %v426
        %v428 = vrot.slane %v427, 4
        %v429 = vadd.f32 %v427, %v428
        %v430 = vrot.slane %v429, 2
        %v431 = vadd.f32 %v429, %v430
        %v432 = vrot.slane %v431, 1
        %v433 = vadd.f32 %v431, %v432
        %v434 = vadd.f32 %v341, %v345
        %v435 = vadd.f32 %v434, %v349
        %v436 = vadd.f32 %v435, %v353
        %v437 = vadd.f32 %v436, %v357
        %v438 = vadd.f32 %v437, %v361
        %v439 = vsel %vm399, %v365, 0.0
        %v440 = vadd.f32 %v438, %v439
        %v441 = vrot.slane %v440, 4
        %v442 = vadd.f32 %v440, %v441
        %v443 = vrot.slane %v442, 2
        %v444 = vadd.f32 %v442, %v443
        %v445 = vrot.slane %v444, 1
        %v446 = vadd.f32 %v444, %v445
        %v447 = vadd.f32 %v366, %v370
        %v448 = vadd.f32 %v447, %v374
        %v449 = vadd.f32 %v448, %v378
        %v450 = vadd.f32 %v449, %v382
        %v451 = vadd.f32 %v450, %v386
        %v452 = vsel %vm399, %v390, 0.0
        %v453 = vadd.f32 %v451, %v452
        %v454 = vrot.slane %v453, 4
        %v455 = vadd.f32 %v453, %v454
        %v456 = vrot.slane %v455, 2
        %v457 = vadd.f32 %v455, %v456
        %v458 = vrot.slane %v457, 1
        %v459 = vadd.f32 %v457, %v458
        %v460 = vadd.f32 %v367, %v371
        %v461 = vadd.f32 %v460, %v375
        %v462 = vadd.f32 %v461, %v379
        %v463 = vadd.f32 %v462, %v383
        %v464 = vadd.f32 %v463, %v387
        %v465 = vsel %vm399, %v391, 0.0
        %v466 = vadd.f32 %v464, %v465
        %v467 = vrot.slane %v466, 4
        %v468 = vadd.f32 %v466, %v467
        %v469 = vrot.slane %v468, 2
        %v470 = vadd.f32 %v468, %v469
        %v471 = vrot.slane %v470, 1
        %v472 = vadd.f32 %v470, %v471
        %v473 = vadd.f32 %v368, %v372
        %v474 = vadd.f32 %v473, %v376
        %v475 = vadd.f32 %v474, %v380
        %v476 = vadd.f32 %v475, %v384
        %v477 = vadd.f32 %v476, %v388
        %v478 = vsel %vm399, %v392, 0.0
        %v479 = vadd.f32 %v477, %v478
        %v480 = vrot.slane %v479, 4
        %v481 = vadd.f32 %v479, %v480
        %v482 = vrot.slane %v481, 2
        %v483 = vadd.f32 %v481, %v482
        %v484 = vrot.slane %v483, 1
        %v485 = vadd.f32 %v483, %v484
        %v486 = vadd.f32 %v369, %v373
        %v487 = vadd.f32 %v486, %v377
        %v488 = vadd.f32 %v487, %v381
        %v489 = vadd.f32 %v488, %v385
        %v490 = vadd.f32 %v489, %v389
        %v491 = vsel %vm399, %v393, 0.0
        %v492 = vadd.f32 %v490, %v491
        %v493 = vrot.slane %v492, 4
        %v494 = vadd.f32 %v492, %v493
        %v495 = vrot.slane %v494, 2
        %v496 = vadd.f32 %v494, %v495
        %v497 = vrot.slane %v496, 1
        %v498 = vadd.f32 %v496, %v497
        %v499 = vld [vmem:[#allocation2] sm:$0x3]
        %v500 = vld [vmem:[%s331] sm:$0xff]
        %v501 = vld [vmem:[%s331 + $0x8] sm:$0xff]
        %v502 = vld [vmem:[%s331 + $0x10] sm:$0xff]
        %v503 = vld [vmem:[%s331 + $0x18] sm:$0xff]
        %v504 = vld [vmem:[%s331 + $0x20] sm:$0xff]
        %v505 = vld [vmem:[%s331 + $0x28] sm:$0xff]
        %v506 = vld [vmem:[%s331 + $0x30] sm:$0xff]
        %v507 = vld [vmem:[%s331 + $0x38] sm:$0xff]
        %v508 = vld [vmem:[%s331 + $0x40] sm:$0xff]
        %v509 = vld [vmem:[%s331 + $0x48] sm:$0xff]
        %v510 = vld [vmem:[%s331 + $0x50] sm:$0xff]
        %v511 = vld [vmem:[%s331 + $0x58] sm:$0xff]
        %v512 = vld [vmem:[%s331 + $0x60] sm:$0xff]
        %v513 = vld [vmem:[%s331 + $0x68] sm:$0xff]
        %v514 = vld [vmem:[%s331 + $0x70] sm:$0xff]
        %v515 = vld [vmem:[%s331 + $0x78] sm:$0xff]
        %v516 = vld [vmem:[%s331 + $0x80] sm:$0xff]
        %v517 = vld [vmem:[%s331 + $0x88] sm:$0xff]
        %v518 = vld [vmem:[%s331 + $0x90] sm:$0xff]
        %v519 = vld [vmem:[%s331 + $0x98] sm:$0xff]
        %v520 = vld [vmem:[%s331 + $0xa0] sm:$0xff]
        %v521 = vld [vmem:[%s331 + $0xa8] sm:$0xff]
        %v522 = vld [vmem:[%s331 + $0xb0] sm:$0xff]
        %v523 = vld [vmem:[%s331 + $0xb8] sm:$0xff]
        %v524 = vld [vmem:[%s331 + $0xc0] sm:$0xff]
        %v525 = vld [vmem:[%s331 + $0xc8] sm:$0xff]
        %v526 = vld [vmem:[%s331 + $0xd0] sm:$0xff]
        %v527 = vld [vmem:[%s331 + $0xd8] sm:$0xff]
        %v528 = vld [vmem:[%s331 + $0xe0] sm:$0xff]
        %v529 = vld [vmem:[%s331 + $0xe8] sm:$0xff]
        %v530 = vld [vmem:[%s331 + $0xf0] sm:$0xff]
        %v531 = vld [vmem:[%s331 + $0xf8] sm:$0xff]
        %v532 = vld [vmem:[%s331 + $0x100] sm:$0xff]
        %v533 = vld [vmem:[%s331 + $0x108] sm:$0xff]
        %v534 = vld [vmem:[%s331 + $0x110] sm:$0xff]
        %v535 = vld [vmem:[%s331 + $0x118] sm:$0xff]
        %v536 = vld [vmem:[%s331 + $0x120] sm:$0xff]
        %v537 = vld [vmem:[%s331 + $0x128] sm:$0xff]
        %v538 = vld [vmem:[%s331 + $0x130] sm:$0xff]
        %v539 = vld [vmem:[%s331 + $0x138] sm:$0xff]
        %v540 = vld [vmem:[%s331 + $0x140] sm:$0xff]
        %v541 = vld [vmem:[%s331 + $0x148] sm:$0xff]
        %v542 = vld [vmem:[%s331 + $0x150] sm:$0xff]
        %v543 = vld [vmem:[%s331 + $0x158] sm:$0xff]
        %v544 = vld [vmem:[%s331 + $0x160] sm:$0xff]
        %v545 = vld [vmem:[%s331 + $0x168] sm:$0xff]
        %v546 = vld [vmem:[%s331 + $0x170] sm:$0xff]
        %v547 = vld [vmem:[%s331 + $0x178] sm:$0xff]
        %v548 = vld [vmem:[%s331 + $0x180] sm:$0xff]
        %v549 = vld [vmem:[%s331 + $0x188] sm:$0xff]
        %v550 = vld [vmem:[%s331 + $0x190] sm:$0xff]
        %v551 = vld [vmem:[%s331 + $0x198] sm:$0xff]
        %v552 = vld [vmem:[%s331 + $0x1a0] sm:$0xff]
        %v553 = vld [vmem:[%s331 + $0x1a8] sm:$0xff]
        %v554 = vld [vmem:[%s331 + $0x1b0] sm:$0xff]
        %v555 = vld [vmem:[%s331 + $0x1b8] sm:$0xff]
        %v556 = vld [vmem:[%s331 + $0x1c0] sm:$0xff]
        %v557 = vld [vmem:[%s331 + $0x1c8] sm:$0xff]
        %v558 = vld [vmem:[%s331 + $0x1d0] sm:$0xff]
        %v559 = vld [vmem:[%s331 + $0x1d8] sm:$0xff]
        %v560 = vld [vmem:[%s331 + $0x1e0] sm:$0xff]
        %v561 = vld [vmem:[%s331 + $0x1e8] sm:$0xff]
        %v562 = vld [vmem:[%s331 + $0x1f0] sm:$0xff]
        %v563 = vld [vmem:[%s331 + $0x1f8] sm:$0xff]
        %vm572 = vcmask 1041409
        %v573 = vsel %vm572, %v459, %v407
        %v574 = vsel %vm572, %v472, %v420
        %v575 = vsel %vm572, %v485, %v433
        %v576 = vsel %vm572, %v498, %v446
        %581 = vmatprep.subr.mxu0 0.0
        %582 = vmatpush1.msra.mxu0 %v515
        %583 = vmatprep.subr.mxu0 0.0
        %584 = vmatpush1.msra.mxu0 %v514
        %585 = vmatprep.subr.mxu0 0.0
        %586 = vmatpush1.msra.mxu0 %v513
        %587 = vmatprep.subr.mxu0 0.0
        %588 = vmatpush1.msra.mxu0 %v512
        %589 = vmatprep.subr.mxu0 0.0
        %590 = vmatpush1.msra.mxu0 %v511
        %591 = vmatprep.subr.mxu0 0.0
        %592 = vmatpush1.msra.mxu0 %v510
        %593 = vmatprep.subr.mxu0 0.0
        %594 = vmatpush1.msra.mxu0 %v509
        %595 = vmatprep.subr.mxu0 0.0
        %596 = vmatpush1.msra.mxu0 %v508
        %597 = vmatprep.subr.mxu0 0.0
        %598 = vmatpush1.msra.mxu0 %v507
        %599 = vmatprep.subr.mxu0 0.0
        %600 = vmatpush1.msra.mxu0 %v506
        %601 = vmatprep.subr.mxu0 0.0
        %602 = vmatpush1.msra.mxu0 %v505
        %603 = vmatprep.subr.mxu0 0.0
        %604 = vmatpush1.msra.mxu0 %v504
        %605 = vmatprep.subr.mxu0 0.0
        %606 = vmatpush1.msra.mxu0 %v503
        %607 = vmatprep.subr.mxu0 0.0
        %608 = vmatpush1.msra.mxu0 %v502
        %609 = vmatprep.subr.mxu0 0.0
        %610 = vmatpush1.msra.mxu0 %v501
        %611 = vmatprep.subr.mxu0 0.0
        %612 = vmatpush1.msra.mxu0 %v500
        %613 = vmatprep.subr.mxu0 0.0
        %614 = vmatpush2.msra.mxu0 %v531
        %615 = vmatprep.subr.mxu0 0.0
        %616 = vmatpush2.msra.mxu0 %v530
        %617 = vmatprep.subr.mxu0 0.0
        %618 = vmatpush2.msra.mxu0 %v529
        %619 = vmatprep.subr.mxu0 0.0
        %620 = vmatpush2.msra.mxu0 %v528
        %621 = vmatprep.subr.mxu0 0.0
        %622 = vmatpush2.msra.mxu0 %v527
        %623 = vmatprep.subr.mxu0 0.0
        %624 = vmatpush2.msra.mxu0 %v526
        %625 = vmatprep.subr.mxu0 0.0
        %626 = vmatpush2.msra.mxu0 %v525
        %627 = vmatprep.subr.mxu0 0.0
        %628 = vmatpush2.msra.mxu0 %v524
        %629 = vmatprep.subr.mxu0 0.0
        %630 = vmatpush2.msra.mxu0 %v523
        %631 = vmatprep.subr.mxu0 0.0
        %632 = vmatpush2.msra.mxu0 %v522
        %633 = vmatprep.subr.mxu0 0.0
        %634 = vmatpush2.msra.mxu0 %v521
        %635 = vmatprep.subr.mxu0 0.0
        %636 = vmatpush2.msra.mxu0 %v520
        %637 = vmatprep.subr.mxu0 0.0
        %638 = vmatpush2.msra.mxu0 %v519
        %639 = vmatprep.subr.mxu0 0.0
        %640 = vmatpush2.msra.mxu0 %v518
        %641 = vmatprep.subr.mxu0 0.0
        %642 = vmatpush2.msra.mxu0 %v517
        %643 = vmatprep.subr.mxu0 0.0
        %644 = vmatpush2.msra.mxu0 %v516
        %645 = vmatprep.mubr.f32.mxu0 %v574
        %646 = vmatmul.mubr.f32.gmra.mxu0 %v573
        %v647 = vpop.f32.mrf.mxu0
        %v648 = vadd.f32 0.0, %v647
        %v649 = vpop.f32.mrf.mxu0
        %650 = vdwg.mxu0
        %651 = vmatprep.subr.mxu0 0.0
        %652 = vmatpush1.msra.mxu0 %v547
        %653 = vmatprep.subr.mxu0 0.0
        %654 = vmatpush1.msra.mxu0 %v546
        %655 = vmatprep.subr.mxu0 0.0
        %656 = vmatpush1.msra.mxu0 %v545
        %657 = vmatprep.subr.mxu0 0.0
        %658 = vmatpush1.msra.mxu0 %v544
        %659 = vmatprep.subr.mxu0 0.0
        %660 = vmatpush1.msra.mxu0 %v543
        %661 = vmatprep.subr.mxu0 0.0
        %662 = vmatpush1.msra.mxu0 %v542
        %663 = vmatprep.subr.mxu0 0.0
        %664 = vmatpush1.msra.mxu0 %v541
        %665 = vmatprep.subr.mxu0 0.0
        %666 = vmatpush1.msra.mxu0 %v540
        %667 = vmatprep.subr.mxu0 0.0
        %668 = vmatpush1.msra.mxu0 %v539
        %669 = vmatprep.subr.mxu0 0.0
        %670 = vmatpush1.msra.mxu0 %v538
        %671 = vmatprep.subr.mxu0 0.0
        %672 = vmatpush1.msra.mxu0 %v537
        %673 = vmatprep.subr.mxu0 0.0
        %674 = vmatpush1.msra.mxu0 %v536
        %675 = vmatprep.subr.mxu0 0.0
        %676 = vmatpush1.msra.mxu0 %v535
        %677 = vmatprep.subr.mxu0 0.0
        %678 = vmatpush1.msra.mxu0 %v534
        %679 = vmatprep.subr.mxu0 0.0
        %680 = vmatpush1.msra.mxu0 %v533
        %681 = vmatprep.subr.mxu0 0.0
        %682 = vmatpush1.msra.mxu0 %v532
        %683 = vmatprep.subr.mxu0 0.0
        %684 = vmatpush2.msra.mxu0 %v563
        %685 = vmatprep.subr.mxu0 0.0
        %686 = vmatpush2.msra.mxu0 %v562
        %687 = vmatprep.subr.mxu0 0.0
        %688 = vmatpush2.msra.mxu0 %v561
        %689 = vmatprep.subr.mxu0 0.0
        %690 = vmatpush2.msra.mxu0 %v560
        %691 = vmatprep.subr.mxu0 0.0
        %692 = vmatpush2.msra.mxu0 %v559
        %693 = vmatprep.subr.mxu0 0.0
        %694 = vmatpush2.msra.mxu0 %v558
        %695 = vmatprep.subr.mxu0 0.0
        %696 = vmatpush2.msra.mxu0 %v557
        %697 = vmatprep.subr.mxu0 0.0
        %698 = vmatpush2.msra.mxu0 %v556
        %699 = vmatprep.subr.mxu0 0.0
        %700 = vmatpush2.msra.mxu0 %v555
        %701 = vmatprep.subr.mxu0 0.0
        %702 = vmatpush2.msra.mxu0 %v554
        %703 = vmatprep.subr.mxu0 0.0
        %704 = vmatpush2.msra.mxu0 %v553
        %705 = vmatprep.subr.mxu0 0.0
        %706 = vmatpush2.msra.mxu0 %v552
        %707 = vmatprep.subr.mxu0 0.0
        %708 = vmatpush2.msra.mxu0 %v551
        %709 = vmatprep.subr.mxu0 0.0
        %710 = vmatpush2.msra.mxu0 %v550
        %711 = vmatprep.subr.mxu0 0.0
        %712 = vmatpush2.msra.mxu0 %v549
        %713 = vmatprep.subr.mxu0 0.0
        %714 = vmatpush2.msra.mxu0 %v548
        %715 = vmatprep.mubr.f32.mxu0 %v576
        %716 = vmatmul.mubr.f32.gmra.mxu0 %v575
        %v717 = vpop.f32.mrf.mxu0
        %v718 = vadd.f32 %v648, %v717
        %v719 = vpop.f32.mrf.mxu0
        %720 = vdwg.mxu0
        %v721 = vadd.f32 %v499, %v718
        %722 = vst [vmem:[#allocation2] sm:$0x3] %v721
        %p723 = scmp.eq.s32.totalorder %s20, 3
        // Predicated region
        $region60: #{_encoder_head_call.1} parent=50 // pred_check
          %p724 = pneg %p723
        $region61: #{_encoder_head_call.1} parent=50 // pred_check_branch
          %726 = sbr.rel (%p724) target = $region63
        $region62: #{_encoder_head_call.1} parent=50 // pred_region
          %v727 = vld [vmem:[#allocation2] sm:$0x3]
          %v728 = vmul.f32 %v727, 0.020408163
          %v729 = vld [vmem:[%s2] sm:$0x1]
          %v731 = vlaneseq
          %v732 = vshrl.u32 %v731, 7
          %v733 = vsub.s32 0, %v732
          %v734 = vrot.slane %v729, %v733
          %v736 = vadd.f32 %v728, %v734
          %737 = vst [vmem:[#allocation4] sm:$0x3] %v736
        $region63: #{_encoder_head_call.1} parent=50 // pred_fallthru
          _
        // Predicated region
        $region64: #{_encoder_head_call.1} parent=50 // pred_check
          %p738 = pneg %p120
        $region65: #{_encoder_head_call.1} parent=50 // pred_check_branch
          %740 = sbr.rel (%p738) target = $region67
        $region66: #{_encoder_head_call.1} parent=50 // pred_region
          %s742 = ssub.s32 32, 32
          %743 = vsyncadd [#allocation5], %s742
          %s744 = smul.addr %s19, 32
          %s745 = scalar_lea.hbm %s3, %s744
          %s747 = sshll.u32 [#allocation4], 4
          %s748 = int_to_ptr.vmem [resolvable:$true] %s747
          %750 = dma.vmem_to_hbm [thread:$0]  %s748, 32, %s745, [#allocation5]
        $region67: #{_encoder_head_call.1} parent=50 // pred_fallthru
          _
        // Predicated region
        $region68: #{_encoder_head_call.1} parent=50 // pred_check
          %p751 = pneg %p120
        $region69: #{_encoder_head_call.1} parent=50 // pred_check_branch
          %753 = sbr.rel (%p751) target = $region71
        $region70: #{_encoder_head_call.1} parent=50 // pred_region
          %754 = dma.done [#allocation5], 32
        $region71: #{_encoder_head_call.1} parent=50 // pred_fallthru
          _
      $region51: #{_encoder_head_call.1} parent=5 // pred_fallthru
        _
      %p755 = scmp.le.s32.totalorder 2, %s10
      // Predicated region
      $region72: #{_encoder_head_call.1} parent=5 // pred_check
        %p756 = pneg %p755
      $region73: #{_encoder_head_call.1} parent=5 // pred_check_branch
        %758 = sbr.rel (%p756) target = $region75
      $region74: #{_encoder_head_call.1} parent=5 // pred_region
        %s759 = ssub.s32 %s10, 2
      $region75: #{_encoder_head_call.1} parent=5 // pred_fallthru
        _
    $region6: #{_encoder_head_call.1} parent=1 // loop_footer
      %s14 = sadd.s32 1, %s10
    $region7: #{_encoder_head_call.1} parent=1 // loop_footer_branch
      %9 = sbr.rel target = $region3
    $region8: #{_encoder_head_call.1} parent=1 // loop_exit
      _
    %760 = vsyncpa [#allocation5], 1
    %s761 = scalar_lea.sflag [#allocation5], 1
    %762 = vsyncpa %s761, 1

</llo_original>
